<compile_context>
chip_gen: v6e
topology: v6e:2x2x1
jax: 0.10.0
libtpu: 0.0.40
codegen_flags: <defaults>
</compile_context>

<pallas_src>
import functools

import jax
import jax.numpy as jnp
from jax.experimental import pallas as pl
from jax.experimental.pallas import tpu as pltpu


# ----------------------------------------------------------------------------- kernel

def _lora_moe_kernel(x_ref, wb_ref, bias_ref, wg_ref, a_ref, rep_ref, b_ref, o_ref):
    x = x_ref[...]                                                     # [TM, D_in]

    # ---- token router: softmax over experts, f32 ----
    logits = jnp.dot(x, wg_ref[...], preferred_element_type=jnp.float32)     # [TM, E]
    logits = logits - jnp.max(logits, axis=-1, keepdims=True)
    p = jnp.exp(logits)
    gates = p * pl.reciprocal(jnp.sum(p, axis=-1, keepdims=True), approx=True)

    # ---- fused LoRA experts: h = x @ [A_0 | A_1 | ...] -> [TM, E*r] ----
    h = jnp.dot(x, a_ref[...], preferred_element_type=jnp.float32)
    # expand per-expert gate to per-(expert, rank) column: [TM, E] @ [E, E*r]
    g_rep = jnp.dot(gates, rep_ref[...], preferred_element_type=jnp.float32)
    hs = (h * g_rep).astype(b_ref.dtype)
    # `scaling` already folded into b_ref on the host
    y = jnp.dot(hs, b_ref[...], preferred_element_type=jnp.float32)          # [TM, TN]

    # ---- frozen base linear last, fused epilogue (one f32 [TM,TN] temp live) ----
    base = jnp.dot(x, wb_ref[...], preferred_element_type=jnp.float32)
    o_ref[...] = (base + bias_ref[...].astype(jnp.float32) + y).astype(o_ref.dtype)


# ----------------------------------------------------------------------------- helpers

def _round_up(v, m):
    return ((v + m - 1) // m) * m


def _cdiv(a, b):
    return -(-a // b)


def _tpu_hw():
    """(physical VMEM bytes per core, #TensorCores per device) with safe fallbacks."""
    vmem = 64 << 20          # conservative default (v7x-sized)
    cores = 1
    try:
        info = pltpu.get_tpu_info()
        vmem = int(getattr(info, "vmem_capacity_bytes", vmem))
    except Exception:
        pass
    try:
        cores = int(getattr(jax.devices()[0], "num_cores", 1) or 1)
    except Exception:
        pass
    if vmem <= (64 << 20):
        cores = max(cores, 2)   # v7x: 2 TCs per chip
    return vmem, cores


def _buffered_supported():
    if not hasattr(pl, "Buffered"):
        return False
    try:
        pl.BlockSpec((8, 128), lambda i: (0, 0), pipeline_mode=pl.Buffered(1))
        return True
    except Exception:
        return False


def _vmem_estimate(tm, tn, d_in, e, er, x_it, w_it, o_it, single_buffer):
    """Bytes of VMEM the plan needs, including the kernel's f32 intermediates."""
    wbuf = 1 if single_buffer else 2
    weight_bytes = wbuf * ((d_in * tn + tn + er * tn + d_in * e + d_in * er) * w_it
                           + e * er * 4)
    stream_bytes = 2 * tm * d_in * x_it + 2 * tm * tn * o_it      # double-buffered x / out
    temp_bytes = 4 * (2 * tm * tn + 2 * tm * er + 2 * tm * e)      # base/y, h/g_rep, logits
    return weight_bytes + stream_bytes + temp_bytes + (2 << 20)


def _choose_tn(d_out, tm, d_in, e, er, x_it, w_it, o_it, budget, single_buffer):
    if d_out % 128 != 0:
        return d_out                      # full-dim block (lane constraint satisfied)
    cands = [t for t in range(d_out, 127, -128) if d_out % t == 0]   # descending
    for t in cands:
        if _vmem_estimate(tm, t, d_in, e, er, x_it, w_it, o_it, single_buffer) <= budget:
            return t
    return cands[-1]                      # smallest (128); best effort


# ----------------------------------------------------------------------------- builder

def _build_call(*, n, d_in, d_out, e, er, tm, tn, n_rows, n_col, out_dtype,
                use_buffered, vmem_limit_bytes, cost_estimate):
    def wspec(shape, index_map):
        # resident / column-tiled weights: single-buffer when requested (block index is
        # constant across the inner row axis, so one DMA bubble per column at most)
        if use_buffered:
            return pl.BlockSpec(shape, index_map, pipeline_mode=pl.Buffered(1))
        return pl.BlockSpec(shape, index_map)

    # grid = (column tiles OUTER, row tiles INNER): weights stream from HBM once.
    in_specs = [
        pl.BlockSpec((tm, d_in), lambda j, i: (i, 0)),     # x rows (re-streamed n_col times)
        wspec((d_in, tn), lambda j, i: (0, j)),            # W_base^T column tile
        wspec((1, tn), lambda j, i: (0, j)),               # bias column tile
        wspec((d_in, e), lambda j, i: (0, 0)),             # W_gate^T (resident)
        wspec((d_in, er), lambda j, i: (0, 0)),            # A_all (resident)
        wspec((e, er), lambda j, i: (0, 0)),               # gate expander (resident)
        wspec((er, tn), lambda j, i: (0, j)),              # B_all * scaling column tile
    ]
    out_specs = pl.BlockSpec((tm, tn), lambda j, i: (i, j))

    return pl.pallas_call(
        _lora_moe_kernel,
        out_shape=jax.ShapeDtypeStruct((n, d_out), out_dtype),
        grid_spec=pltpu.PrefetchScalarGridSpec(
            num_scalar_prefetch=0,
            grid=(n_col, n_rows),
            in_specs=in_specs,
            out_specs=out_specs,
        ),
        compiler_params=pltpu.CompilerParams(
            dimension_semantics=("parallel", "parallel"),
            vmem_limit_bytes=int(vmem_limit_bytes),
        ),
        cost_estimate=cost_estimate,
    )


# ----------------------------------------------------------------------------- wrapper

def lora_moe_forward(x, wb_t, bias, wg_t, a_stack, b_stack, *, scaling,
                     router_type="token", tm=None, tn=None,
                     compute_dtype=None, vmem_limit_bytes=None):
    """x: [N, D_in] -> [N, D_out].

    Weights are passed pre-transposed (row-major x @ W form):
      wb_t [D_in, D_out], bias [D_out] or [1, D_out], wg_t [D_in, E],
      a_stack [E, D_in, r] (= A_e.weight.T), b_stack [E, r, D_out] (= B_e.weight.T).
    compute_dtype (e.g. jnp.bfloat16) optionally casts x and all weights for the MXU
    while the output keeps x's original dtype.
    """
    if router_type != "token":
        # TODO(synk): router_type == "instance" (mean gate over tokens, repeated) needs a
        # cross-row-tile reduction and is not fused in-kernel; only the token router is.
        raise NotImplementedError("only router_type='token' is implemented in-kernel")
    # TODO(synk): training-mode LoRA dropout is not implemented (eval-mode forward only).
    # TODO(synk): optional fp8 storage of the frozen base weight on v7x is not implemented.

    n, d_in = x.shape
    d_out = wb_t.shape[1]
    e, _, r = a_stack.shape
    er = e * r
    out_dtype = x.dtype

    # ---- optional low-precision operand path (several-x MXU speedup for f32 models) ----
    if compute_dtype is not None:
        x = x.astype(compute_dtype)
        wb_t = wb_t.astype(compute_dtype)
        wg_t = wg_t.astype(compute_dtype)
        a_stack = a_stack.astype(compute_dtype)
        b_stack = b_stack.astype(compute_dtype)

    # ---- host-side weight prep: fuse experts, fold scaling ----
    a_all = jnp.transpose(a_stack, (1, 0, 2)).reshape(d_in, er)              # [D_in, E*r]
    b_all = (b_stack.astype(jnp.float32) * scaling).astype(b_stack.dtype)
    b_all = b_all.reshape(er, d_out)                                         # [E*r, D_out]
    rep = jnp.repeat(jnp.eye(e, dtype=jnp.float32), r, axis=1)               # [E, E*r]
    bias2d = bias.reshape(1, d_out)

    x_it = jnp.dtype(x.dtype).itemsize
    w_it = jnp.dtype(wb_t.dtype).itemsize
    o_it = jnp.dtype(out_dtype).itemsize

    # ---- generation-aware tiling / VMEM budgeting ----
    hw_vmem, hw_cores = _tpu_hw()
    budget = int(0.85 * hw_vmem)

    if tm is None:
        tm = 512 if hw_vmem >= (100 << 20) else 256       # v5e/v6e vs v7x
    tm_eff = max(8, min(_round_up(int(tm), 8), _round_up(n, 8)))

    buffered_ok = _buffered_supported()
    est = functools.partial(_vmem_estimate, d_in=d_in, e=e, er=er,
                            x_it=x_it, w_it=w_it, o_it=o_it)
    if tn is None:
        tn = _choose_tn(d_out, tm_eff, d_in, e, er, x_it, w_it, o_it, budget, False)
        use_buffered = False
        if buffered_ok:
            tn_sb = _choose_tn(d_out, tm_eff, d_in, e, er, x_it, w_it, o_it, budget, True)
            # single-buffer resident weights only when it buys a bigger column tile or
            # the double-buffered plan would not fit the budget at all
            if tn_sb > tn or est(tm_eff, tn, single_buffer=False) > budget:
                tn, use_buffered = tn_sb, True
    else:
        assert d_out % tn == 0 and (tn == d_out or tn % 128 == 0), \
            "tn must divide D_out and be a multiple of 128 (or equal D_out)"
        use_buffered = buffered_ok and est(tm_eff, tn, single_buffer=False) > budget

    n_col = d_out // tn
    n_rows = _cdiv(n, tm_eff)

    # guarantee >=2 blocks on a parallel axis for 2-TensorCore devices
    if hw_cores >= 2 and n_rows == 1 and n_col == 1 and tm_eff >= 16:
        tm_eff = _round_up(tm_eff // 2, 8)
        n_rows = _cdiv(n, tm_eff)

    need = est(tm_eff, tn, single_buffer=use_buffered)
    if vmem_limit_bytes is None:
        vmem_limit_bytes = min(max(int(1.3 * need), 32 << 20), int(0.9 * hw_vmem))

    # ---- advisory cost estimate for the XLA scheduler ----
    flops = 2 * n * (d_in * d_out + er * d_out) + 2 * n * n_col * (d_in * (e + er) + e * er)
    bytes_accessed = (n * d_in * x_it * n_col                               # x re-streamed
                      + (d_in * d_out + d_out + d_in * e + d_in * er + er * d_out) * w_it
                      + e * er * 4
                      + n * d_out * o_it)
    cost = pl.CostEstimate(flops=int(flops), transcendentals=int(n * e * n_col),
                           bytes_accessed=int(bytes_accessed))

    args = (x, wb_t, bias2d, wg_t, a_all, rep, b_all)
    build = functools.partial(
        _build_call, n=n, d_in=d_in, d_out=d_out, e=e, er=er,
        tm=tm_eff, tn=tn, n_rows=n_rows, n_col=n_col, out_dtype=out_dtype,
        vmem_limit_bytes=vmem_limit_bytes, cost_estimate=cost)

    if not use_buffered:
        return build(use_buffered=False)(*args)
    try:
        return build(use_buffered=True)(*args)
    except Exception as err:  # narrow fallback: only pipeline_mode / Buffered lowering issues
        msg = str(err).lower()
        if "buffer" in msg or "pipeline" in msg:
            return build(use_buffered=False)(*args)
        raise


# ----------------------------------------------------------------------------- reference

def reference(x, wb_t, bias, wg_t, a_stack, b_stack, scaling):
    """Pure-JAX mirror of the original PyTorch module (token router, eval mode)."""
    base = x @ wb_t + bias.reshape(1, -1)
    gates = jax.nn.softmax(x @ wg_t, axis=-1)                        # [N, E]
    lora = jnp.einsum("nd,edr->enr", x, a_stack)                     # per-expert x @ A_e^T
    lora = jnp.einsum("enr,erk->enk", lora, b_stack) * scaling       # @ B_e^T, scaled
    mix = jnp.einsum("ne,enk->nk", gates, lora)                      # gate-weighted sum
    return base + mix


if __name__ == "__main__":
    # Small, lane-dense shapes consistent with the module's forward (x: [batch, tokens, D_in]).
    batch, tokens = 2, 8
    d_in, d_out = 128, 128
    expert_nums = 4
    lora_r, lora_alpha = 4, 8
    scaling = lora_alpha / lora_r

    key = jax.random.PRNGKey(0)
    kx, kwb, kb, kg, ka, kbb = jax.random.split(key, 6)

    x = jax.random.normal(kx, (batch, tokens, d_in), dtype=jnp.float32)

    # Deterministic parameters, stored pre-transposed for the kernel.
    wb_t = jax.random.normal(kwb, (d_in, d_out), dtype=jnp.float32) * 0.05
    bias = jax.random.normal(kb, (1, d_out), dtype=jnp.float32) * 0.05
    wg_t = jax.random.normal(kg, (d_in, expert_nums), dtype=jnp.float32) * 0.05
    # kaiming-uniform-ish A; B given small random values (the module zero-inits B,
    # which would make the LoRA branch identically zero and untestable).
    bound_a = (6.0 / (6.0 * d_in)) ** 0.5
    a_stack = jax.random.uniform(ka, (expert_nums, d_in, lora_r),
                                 minval=-bound_a, maxval=bound_a, dtype=jnp.float32)
    b_stack = jax.random.normal(kbb, (expert_nums, lora_r, d_out), dtype=jnp.float32) * 0.05

    x2d = x.reshape(batch * tokens, d_in)
    out2d = lora_moe_forward(x2d, wb_t, bias, wg_t, a_stack, b_stack, scaling=scaling)
    out = out2d.reshape(batch, tokens, d_out)
    jax.block_until_ready(out)

    ref = reference(x2d, wb_t, bias, wg_t, a_stack, b_stack,
                    scaling).reshape(batch, tokens, d_out)
    err = float(jnp.max(jnp.abs(out - ref)))
    # Tolerance accounts for default MXU precision (bf16 operand rounding), the EUP
    # approximate reciprocal in the softmax, and the equivalent-but-reordered LoRA fusion.
    assert jnp.allclose(out, ref, atol=5e-3, rtol=5e-3), f"max abs err = {err}"

    print("KERNEL_OK")
</pallas_src>

<mosaic_0001>
module attributes {stable_mosaic.version = 11 : i64} {
  func.func @_lora_moe_kernel(%arg0: i32, %arg1: i32, %arg2: memref<8x128xf32, #tpu.memory_space<vmem>>, %arg3: memref<128x128xf32, #tpu.memory_space<vmem>>, %arg4: memref<1x128xf32, #tpu.memory_space<vmem>>, %arg5: memref<128x4xf32, #tpu.memory_space<vmem>>, %arg6: memref<128x16xf32, #tpu.memory_space<vmem>>, %arg7: memref<4x16xf32, #tpu.memory_space<vmem>>, %arg8: memref<16x128xf32, #tpu.memory_space<vmem>>, %arg9: memref<8x128xf32, #tpu.memory_space<vmem>>) attributes {dimension_semantics = [#tpu.dimension_semantics<parallel>, #tpu.dimension_semantics<parallel>], iteration_bounds = array<i64: 1, 2>, scalar_prefetch = 0 : i64, scratch_operands = 0 : i64, tpu.core_type = #tpu.core_type<tc>, window_params = [{transform_indices = @transform_0, window_bounds = array<i64: 8, 128>}, {transform_indices = @transform_1, window_bounds = array<i64: 128, 128>}, {transform_indices = @transform_2, window_bounds = array<i64: 1, 128>}, {pipeline_mode = #tpu.pipeline_mode<synchronous>, transform_indices = @transform_3, window_bounds = array<i64: 128, 4>}, {pipeline_mode = #tpu.pipeline_mode<synchronous>, transform_indices = @transform_4, window_bounds = array<i64: 128, 16>}, {pipeline_mode = #tpu.pipeline_mode<synchronous>, transform_indices = @transform_5, window_bounds = array<i64: 4, 16>}, {transform_indices = @transform_6, window_bounds = array<i64: 16, 128>}, {transform_indices = @transform_7, window_bounds = array<i64: 8, 128>}]} {
    %c0 = arith.constant 0 : index
    %c0_0 = arith.constant 0 : index
    %0 = vector.load %arg2[%c0, %c0_0] : memref<8x128xf32, #tpu.memory_space<vmem>>, vector<8x128xf32>
    %c0_1 = arith.constant 0 : index
    %c0_2 = arith.constant 0 : index
    %1 = vector.load %arg5[%c0_1, %c0_2] : memref<128x4xf32, #tpu.memory_space<vmem>>, vector<128x4xf32>
    %cst = arith.constant dense<0.000000e+00> : vector<8x4xf32>
    %2 = tpu.matmul %0, %1, %cst {dimension_numbers = #tpu.dot_dimension_numbers<[1], [0], [0], [1], [0, 0, 1, 1], [], []>} : vector<8x128xf32>, vector<128x4xf32>, vector<8x4xf32> -> vector<8x4xf32>
    %cst_3 = arith.constant dense<0xFF800000> : vector<8xf32>
    %3 = vector.multi_reduction <maximumf>, %2, %cst_3 [1] : vector<8x4xf32> to vector<8xf32>
    %4 = vector.shape_cast %3 : vector<8xf32> to vector<8x1xf32>
    %5 = vector.broadcast %4 : vector<8x1xf32> to vector<8x4xf32>
    %6 = arith.subf %2, %5 : vector<8x4xf32>
    %7 = math.exp %6 : vector<8x4xf32>
    %cst_4 = arith.constant dense<0.000000e+00> : vector<8xf32>
    %8 = vector.multi_reduction <add>, %7, %cst_4 [1] : vector<8x4xf32> to vector<8xf32>
    %9 = vector.shape_cast %8 : vector<8xf32> to vector<8x1xf32>
    %10 = tpu.reciprocal %9 {approx = true} : vector<8x1xf32> -> vector<8x1xf32>
    %11 = vector.broadcast %10 : vector<8x1xf32> to vector<8x4xf32>
    %12 = arith.mulf %7, %11 : vector<8x4xf32>
    %c0_5 = arith.constant 0 : index
    %c0_6 = arith.constant 0 : index
    %13 = vector.load %arg6[%c0_5, %c0_6] : memref<128x16xf32, #tpu.memory_space<vmem>>, vector<128x16xf32>
    %cst_7 = arith.constant dense<0.000000e+00> : vector<8x16xf32>
    %14 = tpu.matmul %0, %13, %cst_7 {dimension_numbers = #tpu.dot_dimension_numbers<[1], [0], [0], [1], [0, 0, 1, 1], [], []>} : vector<8x128xf32>, vector<128x16xf32>, vector<8x16xf32> -> vector<8x16xf32>
    %c0_8 = arith.constant 0 : index
    %c0_9 = arith.constant 0 : index
    %15 = vector.load %arg7[%c0_8, %c0_9] : memref<4x16xf32, #tpu.memory_space<vmem>>, vector<4x16xf32>
    %cst_10 = arith.constant dense<0.000000e+00> : vector<8x16xf32>
    %16 = tpu.matmul %12, %15, %cst_10 {dimension_numbers = #tpu.dot_dimension_numbers<[1], [0], [0], [1], [0, 0, 1, 1], [], []>} : vector<8x4xf32>, vector<4x16xf32>, vector<8x16xf32> -> vector<8x16xf32>
    %17 = arith.mulf %14, %16 : vector<8x16xf32>
    %c0_11 = arith.constant 0 : index
    %c0_12 = arith.constant 0 : index
    %18 = vector.load %arg8[%c0_11, %c0_12] : memref<16x128xf32, #tpu.memory_space<vmem>>, vector<16x128xf32>
    %cst_13 = arith.constant dense<0.000000e+00> : vector<8x128xf32>
    %19 = tpu.matmul %17, %18, %cst_13 {dimension_numbers = #tpu.dot_dimension_numbers<[1], [0], [0], [1], [0, 0, 1, 1], [], []>} : vector<8x16xf32>, vector<16x128xf32>, vector<8x128xf32> -> vector<8x128xf32>
    %c0_14 = arith.constant 0 : index
    %c0_15 = arith.constant 0 : index
    %20 = vector.load %arg3[%c0_14, %c0_15] : memref<128x128xf32, #tpu.memory_space<vmem>>, vector<128x128xf32>
    %cst_16 = arith.constant dense<0.000000e+00> : vector<8x128xf32>
    %21 = tpu.matmul %0, %20, %cst_16 {dimension_numbers = #tpu.dot_dimension_numbers<[1], [0], [0], [1], [0, 0, 1, 1], [], []>} : vector<8x128xf32>, vector<128x128xf32>, vector<8x128xf32> -> vector<8x128xf32>
    %c0_17 = arith.constant 0 : index
    %c0_18 = arith.constant 0 : index
    %22 = vector.load %arg4[%c0_17, %c0_18] : memref<1x128xf32, #tpu.memory_space<vmem>>, vector<1x128xf32>
    %23 = vector.broadcast %22 : vector<1x128xf32> to vector<8x128xf32>
    %24 = arith.addf %21, %23 : vector<8x128xf32>
    %25 = arith.addf %24, %19 : vector<8x128xf32>
    %c0_19 = arith.constant 0 : index
    %c0_20 = arith.constant 0 : index
    %26 = vector.load %arg9[%c0_19, %c0_20] : memref<8x128xf32, #tpu.memory_space<vmem>>, vector<8x128xf32>
    tpu.vector_store %arg9[%c0_19, %c0_20], %25 {strides = array<i32>} : memref<8x128xf32, #tpu.memory_space<vmem>>, vector<8x128xf32>,
    return
  }
  func.func @transform_0(%arg0: i32, %arg1: i32) -> (i32, i32) {
    %c0_i32 = arith.constant 0 : i32
    %c0_i32_0 = arith.constant 0 : i32
    return %arg1, %c0_i32 : i32, i32
  }
  func.func @transform_1(%arg0: i32, %arg1: i32) -> (i32, i32) {
    %c0_i32 = arith.constant 0 : i32
    %c0_i32_0 = arith.constant 0 : i32
    return %c0_i32, %arg0 : i32, i32
  }
  func.func @transform_2(%arg0: i32, %arg1: i32) -> (i32, i32) {
    %c0_i32 = arith.constant 0 : i32
    %c0_i32_0 = arith.constant 0 : i32
    return %c0_i32, %arg0 : i32, i32
  }
  func.func @transform_3(%arg0: i32, %arg1: i32) -> (i32, i32) {
    %c0_i32 = arith.constant 0 : i32
    %c0_i32_0 = arith.constant 0 : i32
    %c0_i32_1 = arith.constant 0 : i32
    return %c0_i32, %c0_i32_0 : i32, i32
  }
  func.func @transform_4(%arg0: i32, %arg1: i32) -> (i32, i32) {
    %c0_i32 = arith.constant 0 : i32
    %c0_i32_0 = arith.constant 0 : i32
    %c0_i32_1 = arith.constant 0 : i32
    return %c0_i32, %c0_i32_0 : i32, i32
  }
  func.func @transform_5(%arg0: i32, %arg1: i32) -> (i32, i32) {
    %c0_i32 = arith.constant 0 : i32
    %c0_i32_0 = arith.constant 0 : i32
    %c0_i32_1 = arith.constant 0 : i32
    return %c0_i32, %c0_i32_0 : i32, i32
  }
  func.func @transform_6(%arg0: i32, %arg1: i32) -> (i32, i32) {
    %c0_i32 = arith.constant 0 : i32
    %c0_i32_0 = arith.constant 0 : i32
    return %c0_i32, %arg0 : i32, i32
  }
  func.func @transform_7(%arg0: i32, %arg1: i32) -> (i32, i32) {
    %c0_i32 = arith.constant 0 : i32
    return %arg1, %arg0 : i32, i32
  }
}

</mosaic_0001>

<llo_original>
// kernel: tpu_custom_call.1
$region0: #{tpu_custom_call.1}
  #allocation0 [shape = 'u32[]', space=smem, size = 0x4, offset = 0x4, fixed_abs, tag = 'smem constant byte address 0x4 - core index']
  #allocation1 [shape = 'u32[144,128]{1,0:T(1,128)}', space=vmem, size = 0x12000, scoped, tag = 'internal scratch']
  %s0 = inlined_call_operand.vmem [shape: f32[16,128], index: 0, kind: input, shape index: {}]
  %s1 = inlined_call_operand.vmem [shape: f32[128,128], index: 1, kind: input, shape index: {}]
  %s2 = inlined_call_operand.vmem [shape: f32[1,128], index: 2, kind: input, shape index: {}]
  %s3 = inlined_call_operand.vmem [shape: f32[128,4], index: 3, kind: input, shape index: {}]
  %s4 = inlined_call_operand.vmem [shape: f32[128,16], index: 4, kind: input, shape index: {}]
  %s5 = inlined_call_operand.vmem [shape: f32[4,16], index: 5, kind: input, shape index: {}]
  %s6 = inlined_call_operand.vmem [shape: f32[16,128], index: 6, kind: input, shape index: {}]
  %s7 = inlined_call_operand.hbm [shape: f32[16,128], index: 7, kind: output, shape index: {}]
  %s8 = sld [smem:[#allocation0]]
  $region61: #{tpu_custom_call.1} parent=0
    _
  %s10 = ssub.s32 1, %s8
  %s11 = scalar_select 0, %s10, %s8
  $region1: #{tpu_custom_call.1} parent=0
    #allocation2 [shape = 'u8[8192]{0}', space=vmem, size = 0x2000, scoped, tag = 'output window, operand 0']
    #allocation3 [shape = 's32[2]{0}', space=sflag, size = 0x8, scoped, tag = 'scoped memory for tpu_custom_call.1']
    %12 = vsyncpa [#allocation3], 0
    %s13 = scalar_lea.sflag [#allocation3], 1
    %14 = vsyncpa %s13, 0
    loop: start=0, step=1, limit=4
    $region2: #{tpu_custom_call.1} parent=1 // loop_pre_header
      _
    $region3: #{tpu_custom_call.1} parent=1 // loop_header
      %s16 = sphi 0, %s20
      %p17 = scmp.ge.s32.totalorder %s16, 4
      %s23 = sphi 0, %s35
      %s24 = sphi 0, %s31
      %s25 = sphi 0, %s23
      %s26 = sphi 0, %s24
      %s27 = sphi 0, %s25
      %s28 = sphi 0, %s26
      %s38 = sphi 0, %s40
      %s41 = sphi 0, %s38
      %s42 = sphi 0, %s41
      %s58 = sphi 0, %s42
      %s64 = sphi 0, %s66
      %s67 = sphi 0, %s64
      %s68 = sphi 0, %s67
      %s84 = sphi 0, %s68
      %s90 = sphi 0, %s92
      %s93 = sphi 0, %s90
      %s94 = sphi 0, %s93
      %s110 = sphi 0, %s94
      %s114 = sphi 0, %s114
      %s116 = sphi 0, %s114
      %s117 = sphi 0, %s116
      %s131 = sphi 0, %s117
      %s135 = sphi 0, %s135
      %s137 = sphi 0, %s135
      %s138 = sphi 0, %s137
      %s152 = sphi 0, %s138
      %s156 = sphi 0, %s156
      %s158 = sphi 0, %s156
      %s159 = sphi 0, %s158
      %s173 = sphi 0, %s159
      %s179 = sphi 0, %s181
      %s182 = sphi 0, %s179
      %s183 = sphi 0, %s182
      %s199 = sphi 0, %s183
      %s207 = sphi 0, %s209
      %s210 = sphi 0, %s207
      %s211 = sphi 0, %s210
      %s227 = sphi 0, %s211
    $region4: #{tpu_custom_call.1} parent=1 // loop_header_branch
      %19 = sbr.rel (%p17) target = $region8
    $region5: #{tpu_custom_call.1} parent=1 // loop_body
      %s21 = ssub.s32 %s16, 1
      %s22 = ssub.s32 %s16, 2
      %s29 = sadd.s32 1, %s24
      %p30 = scmp.ge.s32.totalorder %s29, 2
      %s31 = scalar_select %p30, 0, %s29
      %s32 = sadd.s32 1, %s23
      %s33 = scalar_select %p30, %s32, %s23
      %p34 = scmp.ge.s32.totalorder %s33, 1
      %s35 = scalar_select %p34, 0, %s33
      %s36 = ssub.s32 %s24, %s31
      %p37 = scmp.eq.s32.totalorder %s36, 0
      %s39 = sadd.s32 %s38, 1
      %s40 = scalar_select %p37, %s38, %s39
      %p43 = pneg %p37
      %p44 = scmp.eq.s32.totalorder %s16, 1
      %p45 = por %p43, %p44
      %p46 = scmp.ne.s32.totalorder %s38, %s41
      %p47 = scmp.eq.s32.totalorder %s16, 0
      %p48 = por %p46, %p47
      %p49 = scmp.ne.s32.totalorder %s38, %s41
      %p50 = scmp.eq.s32.totalorder %s21, 1
      %p51 = por %p49, %p50
      %p52 = scmp.ne.s32.totalorder %s41, %s42
      %p53 = scmp.eq.s32.totalorder %s21, 0
      %p54 = por %p52, %p53
      %p55 = scmp.ne.s32.totalorder %s41, %s42
      %p56 = scmp.eq.s32.totalorder %s22, 1
      %p57 = por %p55, %p56
      %p59 = scmp.ne.s32.totalorder %s42, %s58
      %p60 = scmp.eq.s32.totalorder %s22, 0
      %p61 = por %p59, %p60
      %s62 = ssub.s32 %s23, %s35
      %p63 = scmp.eq.s32.totalorder %s62, 0
      %s65 = sadd.s32 %s64, 1
      %s66 = scalar_select %p63, %s64, %s65
      %p69 = pneg %p63
      %p70 = scmp.eq.s32.totalorder %s16, 1
      %p71 = por %p69, %p70
      %p72 = scmp.ne.s32.totalorder %s64, %s67
      %p73 = scmp.eq.s32.totalorder %s16, 0
      %p74 = por %p72, %p73
      %p75 = scmp.ne.s32.totalorder %s64, %s67
      %p76 = scmp.eq.s32.totalorder %s21, 1
      %p77 = por %p75, %p76
      %p78 = scmp.ne.s32.totalorder %s67, %s68
      %p79 = scmp.eq.s32.totalorder %s21, 0
      %p80 = por %p78, %p79
      %p81 = scmp.ne.s32.totalorder %s67, %s68
      %p82 = scmp.eq.s32.totalorder %s22, 1
      %p83 = por %p81, %p82
      %p85 = scmp.ne.s32.totalorder %s68, %s84
      %p86 = scmp.eq.s32.totalorder %s22, 0
      %p87 = por %p85, %p86
      %s88 = ssub.s32 %s23, %s35
      %p89 = scmp.eq.s32.totalorder %s88, 0
      %s91 = sadd.s32 %s90, 1
      %s92 = scalar_select %p89, %s90, %s91
      %p95 = pneg %p89
      %p96 = scmp.eq.s32.totalorder %s16, 1
      %p97 = por %p95, %p96
      %p98 = scmp.ne.s32.totalorder %s90, %s93
      %p99 = scmp.eq.s32.totalorder %s16, 0
      %p100 = por %p98, %p99
      %p101 = scmp.ne.s32.totalorder %s90, %s93
      %p102 = scmp.eq.s32.totalorder %s21, 1
      %p103 = por %p101, %p102
      %p104 = scmp.ne.s32.totalorder %s93, %s94
      %p105 = scmp.eq.s32.totalorder %s21, 0
      %p106 = por %p104, %p105
      %p107 = scmp.ne.s32.totalorder %s93, %s94
      %p108 = scmp.eq.s32.totalorder %s22, 1
      %p109 = por %p107, %p108
      %p111 = scmp.ne.s32.totalorder %s94, %s110
      %p112 = scmp.eq.s32.totalorder %s22, 0
      %p113 = por %p111, %p112
      %s115 = sadd.s32 %s114, 1
      %p118 = scmp.eq.s32.totalorder %s16, 1
      %p119 = scmp.ne.s32.totalorder %s114, %s116
      %p120 = scmp.eq.s32.totalorder %s16, 0
      %p121 = por %p119, %p120
      %p122 = scmp.ne.s32.totalorder %s114, %s116
      %p123 = scmp.eq.s32.totalorder %s21, 1
      %p124 = por %p122, %p123
      %p125 = scmp.ne.s32.totalorder %s116, %s117
      %p126 = scmp.eq.s32.totalorder %s21, 0
      %p127 = por %p125, %p126
      %p128 = scmp.ne.s32.totalorder %s116, %s117
      %p129 = scmp.eq.s32.totalorder %s22, 1
      %p130 = por %p128, %p129
      %p132 = scmp.ne.s32.totalorder %s117, %s131
      %p133 = scmp.eq.s32.totalorder %s22, 0
      %p134 = por %p132, %p133
      %s136 = sadd.s32 %s135, 1
      %p139 = scmp.eq.s32.totalorder %s16, 1
      %p140 = scmp.ne.s32.totalorder %s135, %s137
      %p141 = scmp.eq.s32.totalorder %s16, 0
      %p142 = por %p140, %p141
      %p143 = scmp.ne.s32.totalorder %s135, %s137
      %p144 = scmp.eq.s32.totalorder %s21, 1
      %p145 = por %p143, %p144
      %p146 = scmp.ne.s32.totalorder %s137, %s138
      %p147 = scmp.eq.s32.totalorder %s21, 0
      %p148 = por %p146, %p147
      %p149 = scmp.ne.s32.totalorder %s137, %s138
      %p150 = scmp.eq.s32.totalorder %s22, 1
      %p151 = por %p149, %p150
      %p153 = scmp.ne.s32.totalorder %s138, %s152
      %p154 = scmp.eq.s32.totalorder %s22, 0
      %p155 = por %p153, %p154
      %s157 = sadd.s32 %s156, 1
      %p160 = scmp.eq.s32.totalorder %s16, 1
      %p161 = scmp.ne.s32.totalorder %s156, %s158
      %p162 = scmp.eq.s32.totalorder %s16, 0
      %p163 = por %p161, %p162
      %p164 = scmp.ne.s32.totalorder %s156, %s158
      %p165 = scmp.eq.s32.totalorder %s21, 1
      %p166 = por %p164, %p165
      %p167 = scmp.ne.s32.totalorder %s158, %s159
      %p168 = scmp.eq.s32.totalorder %s21, 0
      %p169 = por %p167, %p168
      %p170 = scmp.ne.s32.totalorder %s158, %s159
      %p171 = scmp.eq.s32.totalorder %s22, 1
      %p172 = por %p170, %p171
      %p174 = scmp.ne.s32.totalorder %s159, %s173
      %p175 = scmp.eq.s32.totalorder %s22, 0
      %p176 = por %p174, %p175
      %s177 = ssub.s32 %s23, %s35
      %p178 = scmp.eq.s32.totalorder %s177, 0
      %s180 = sadd.s32 %s179, 1
      %s181 = scalar_select %p178, %s179, %s180
      %p184 = pneg %p178
      %p185 = scmp.eq.s32.totalorder %s16, 1
      %p186 = por %p184, %p185
      %p187 = scmp.ne.s32.totalorder %s179, %s182
      %p188 = scmp.eq.s32.totalorder %s16, 0
      %p189 = por %p187, %p188
      %p190 = scmp.ne.s32.totalorder %s179, %s182
      %p191 = scmp.eq.s32.totalorder %s21, 1
      %p192 = por %p190, %p191
      %p193 = scmp.ne.s32.totalorder %s182, %s183
      %p194 = scmp.eq.s32.totalorder %s21, 0
      %p195 = por %p193, %p194
      %p196 = scmp.ne.s32.totalorder %s182, %s183
      %p197 = scmp.eq.s32.totalorder %s22, 1
      %p198 = por %p196, %p197
      %p200 = scmp.ne.s32.totalorder %s183, %s199
      %p201 = scmp.eq.s32.totalorder %s22, 0
      %p202 = por %p200, %p201
      %s203 = ssub.s32 %s24, %s31
      %s204 = ssub.s32 %s23, %s35
      %s205 = sor.u32 %s203, %s204
      %p206 = scmp.eq.s32.totalorder %s205, 0
      %s208 = sadd.s32 %s207, 1
      %s209 = scalar_select %p206, %s207, %s208
      %p212 = pneg %p206
      %p213 = scmp.eq.s32.totalorder %s16, 1
      %p214 = por %p212, %p213
      %p215 = scmp.ne.s32.totalorder %s207, %s210
      %p216 = scmp.eq.s32.totalorder %s16, 0
      %p217 = por %p215, %p216
      %p218 = scmp.ne.s32.totalorder %s207, %s210
      %p219 = scmp.eq.s32.totalorder %s21, 1
      %p220 = por %p218, %p219
      %p221 = scmp.ne.s32.totalorder %s210, %s211
      %p222 = scmp.eq.s32.totalorder %s21, 0
      %p223 = por %p221, %p222
      %p224 = scmp.ne.s32.totalorder %s210, %s211
      %p225 = scmp.eq.s32.totalorder %s22, 1
      %p226 = por %p224, %p225
      %p228 = scmp.ne.s32.totalorder %s211, %s227
      %p229 = scmp.eq.s32.totalorder %s22, 0
      %p230 = por %p228, %p229
      %p231 = scmp.le.s32.totalorder 1, %s16
      %p232 = scmp.lt.s32.totalorder %s16, 3
      %p233 = pnand %p231, %p232
      %p234 = pneg %p233
      // Predicated region
      $region9: #{tpu_custom_call.1} parent=5 // pred_check
        _
      $region10: #{tpu_custom_call.1} parent=5 // pred_check_branch
        %236 = sbr.rel (%p233) target = $region12
      $region11: #{tpu_custom_call.1} parent=5 // pred_region
        %s237 = ssub.s32 %s16, 1
        // Predicated region
        $region13: #{tpu_custom_call.1} parent=11 // pred_check
          %p238 = pneg %p80
        $region14: #{tpu_custom_call.1} parent=11 // pred_check_branch
          %240 = sbr.rel (%p238) target = $region16
        $region15: #{tpu_custom_call.1} parent=11 // pred_region
          %p241 = scmp.lt.s32.totalorder %s25, 0
          %s242 = scalar_select %p241, %s25, 0
          %s243 = smul.addr %s242, 8
          %s244 = scalar_lea.vmem %s1, %s243
        $region16: #{tpu_custom_call.1} parent=11 // pred_fallthru
          _
        // Predicated region
        $region17: #{tpu_custom_call.1} parent=11 // pred_check
          %p245 = pneg %p106
        $region18: #{tpu_custom_call.1} parent=11 // pred_check_branch
          %247 = sbr.rel (%p245) target = $region20
        $region19: #{tpu_custom_call.1} parent=11 // pred_region
          %p248 = scmp.lt.s32.totalorder %s25, 0
          %s249 = scalar_select %p248, %s25, 0
          %s250 = scalar_lea.vmem %s2, %s249
        $region20: #{tpu_custom_call.1} parent=11 // pred_fallthru
          _
        // Predicated region
        $region21: #{tpu_custom_call.1} parent=11 // pred_check
          %p251 = pneg %p127
        $region22: #{tpu_custom_call.1} parent=11 // pred_check_branch
          %253 = sbr.rel (%p251) target = $region24
        $region23: #{tpu_custom_call.1} parent=11 // pred_region
          _
        $region24: #{tpu_custom_call.1} parent=11 // pred_fallthru
          _
        // Predicated region
        $region25: #{tpu_custom_call.1} parent=11 // pred_check
          %p254 = pneg %p148
        $region26: #{tpu_custom_call.1} parent=11 // pred_check_branch
          %256 = sbr.rel (%p254) target = $region28
        $region27: #{tpu_custom_call.1} parent=11 // pred_region
          _
        $region28: #{tpu_custom_call.1} parent=11 // pred_fallthru
          _
        // Predicated region
        $region29: #{tpu_custom_call.1} parent=11 // pred_check
          %p257 = pneg %p169
        $region30: #{tpu_custom_call.1} parent=11 // pred_check_branch
          %259 = sbr.rel (%p257) target = $region32
        $region31: #{tpu_custom_call.1} parent=11 // pred_region
          _
        $region32: #{tpu_custom_call.1} parent=11 // pred_fallthru
          _
        // Predicated region
        $region33: #{tpu_custom_call.1} parent=11 // pred_check
          %p260 = pneg %p195
        $region34: #{tpu_custom_call.1} parent=11 // pred_check_branch
          %262 = sbr.rel (%p260) target = $region36
        $region35: #{tpu_custom_call.1} parent=11 // pred_region
          %p263 = scmp.lt.s32.totalorder %s25, 0
          %s264 = scalar_select %p263, %s25, 0
          %s265 = smul.addr %s264, 8
          %s266 = scalar_lea.vmem %s6, %s265
        $region36: #{tpu_custom_call.1} parent=11 // pred_fallthru
          _
      $region12: #{tpu_custom_call.1} parent=5 // pred_fallthru
        _
      %p267 = scmp.lt.s32.totalorder %s16, 2
      // Predicated region
      $region37: #{tpu_custom_call.1} parent=5 // pred_check
        %p268 = pneg %p267
      $region38: #{tpu_custom_call.1} parent=5 // pred_check_branch
        %270 = sbr.rel (%p268) target = $region40
      $region39: #{tpu_custom_call.1} parent=5 // pred_region
        // Predicated region
        $region41: #{tpu_custom_call.1} parent=39 // pred_check
          %p271 = pneg %p48
        $region42: #{tpu_custom_call.1} parent=39 // pred_check_branch
          %273 = sbr.rel (%p271) target = $region44
        $region43: #{tpu_custom_call.1} parent=39 // pred_region
          %p274 = scmp.lt.s32.totalorder %s24, 1
          %s275 = scalar_select %p274, %s24, 1
          %s276 = smul.addr %s275, 8
          %s277 = scalar_lea.vmem %s0, %s276
        $region44: #{tpu_custom_call.1} parent=39 // pred_fallthru
          _
      $region40: #{tpu_custom_call.1} parent=5 // pred_fallthru
        _
      %p278 = scmp.le.s32.totalorder 1, %s16
      %p279 = scmp.lt.s32.totalorder %s16, 3
      %p280 = pnand %p278, %p279
      %p281 = pneg %p280
      // Predicated region
      $region45: #{tpu_custom_call.1} parent=5 // pred_check
        _
      $region46: #{tpu_custom_call.1} parent=5 // pred_check_branch
        %283 = sbr.rel (%p280) target = $region48
      $region47: #{tpu_custom_call.1} parent=5 // pred_region
        %s284 = ssub.s32 %s16, 1
        %p285 = scmp.lt.s32.totalorder %s26, 1
        %s286 = scalar_select %p285, %s26, 1
        %s287 = smul.addr %s286, 8
        %s288 = scalar_lea.vmem %s0, %s287
        %p289 = pneg %p54
        %p290 = pneg %p51
        %p291 = scmp.lt.s32.totalorder %s25, 0
        %s292 = scalar_select %p291, %s25, 0
        %s293 = smul.addr %s292, 8
        %s294 = scalar_lea.vmem %s1, %s293
        %p295 = pneg %p80
        %p296 = pneg %p77
        %p297 = scmp.lt.s32.totalorder %s25, 0
        %s298 = scalar_select %p297, %s25, 0
        %s299 = scalar_lea.vmem %s2, %s298
        %p300 = pneg %p106
        %p301 = pneg %p103
        %p302 = pneg %p127
        %p303 = pneg %p124
        %p304 = pneg %p148
        %p305 = pneg %p145
        %p306 = pneg %p169
        %p307 = pneg %p166
        %p308 = scmp.lt.s32.totalorder %s25, 0
        %s309 = scalar_select %p308, %s25, 0
        %s310 = smul.addr %s309, 8
        %s311 = scalar_lea.vmem %s6, %s310
        %p312 = pneg %p195
        %p313 = pneg %p192
        %p314 = pneg %p223
        %p315 = pneg %p220
        %s316 = sand.u32 %s210, 1
        %s317 = scalar_lea.sflag [#allocation3], %s316
        %s318 = sand.u32 %s210, 1
        %s319 = smul.addr %s318, 8
        %s320 = scalar_lea.vmem [#allocation2], %s319
        %p321 = scmp.lt.s32.totalorder %s26, 1
        %s322 = scalar_select %p321, %s26, 1
        %s323 = smul.addr %s322, 8
        %s324 = scalar_lea.vmem %s0, %s323
        %p325 = scmp.lt.s32.totalorder %s25, 0
        %s326 = scalar_select %p325, %s25, 0
        %s327 = smul.addr %s326, 8
        %s328 = scalar_lea.vmem %s1, %s327
        %p329 = scmp.lt.s32.totalorder %s25, 0
        %s330 = scalar_select %p329, %s25, 0
        %s331 = scalar_lea.vmem %s2, %s330
        %p332 = scmp.lt.s32.totalorder %s25, 0
        %s333 = scalar_select %p332, %s25, 0
        %s334 = smul.addr %s333, 8
        %s335 = scalar_lea.vmem %s6, %s334
        %v336 = vld [vmem:[%s324] sm:$0xff]
        %v337 = vld [vmem:[%s3] sm:$0xff]
        %v338 = vld [vmem:[%s3 + $0x8] sm:$0xff]
        %v339 = vld [vmem:[%s3 + $0x10] sm:$0xff]
        %v340 = vld [vmem:[%s3 + $0x18] sm:$0xff]
        %v341 = vld [vmem:[%s3 + $0x20] sm:$0xff]
        %v342 = vld [vmem:[%s3 + $0x28] sm:$0xff]
        %v343 = vld [vmem:[%s3 + $0x30] sm:$0xff]
        %v344 = vld [vmem:[%s3 + $0x38] sm:$0xff]
        %v345 = vld [vmem:[%s3 + $0x40] sm:$0xff]
        %v346 = vld [vmem:[%s3 + $0x48] sm:$0xff]
        %v347 = vld [vmem:[%s3 + $0x50] sm:$0xff]
        %v348 = vld [vmem:[%s3 + $0x58] sm:$0xff]
        %v349 = vld [vmem:[%s3 + $0x60] sm:$0xff]
        %v350 = vld [vmem:[%s3 + $0x68] sm:$0xff]
        %v351 = vld [vmem:[%s3 + $0x70] sm:$0xff]
        %v352 = vld [vmem:[%s3 + $0x78] sm:$0xff]
        %353 = vmatprep.subr.mxu0 0.0
        %354 = vmatpush1.msra.mxu0 %v352
        %355 = vmatprep.subr.mxu0 0.0
        %356 = vmatpush1.msra.mxu0 %v351
        %357 = vmatprep.subr.mxu0 0.0
        %358 = vmatpush1.msra.mxu0 %v350
        %359 = vmatprep.subr.mxu0 0.0
        %360 = vmatpush1.msra.mxu0 %v349
        %361 = vmatprep.subr.mxu0 0.0
        %362 = vmatpush1.msra.mxu0 %v348
        %363 = vmatprep.subr.mxu0 0.0
        %364 = vmatpush1.msra.mxu0 %v347
        %365 = vmatprep.subr.mxu0 0.0
        %366 = vmatpush1.msra.mxu0 %v346
        %367 = vmatprep.subr.mxu0 0.0
        %368 = vmatpush1.msra.mxu0 %v345
        %369 = vmatprep.subr.mxu0 0.0
        %370 = vmatpush1.msra.mxu0 %v344
        %371 = vmatprep.subr.mxu0 0.0
        %372 = vmatpush1.msra.mxu0 %v343
        %373 = vmatprep.subr.mxu0 0.0
        %374 = vmatpush1.msra.mxu0 %v342
        %375 = vmatprep.subr.mxu0 0.0
        %376 = vmatpush1.msra.mxu0 %v341
        %377 = vmatprep.subr.mxu0 0.0
        %378 = vmatpush1.msra.mxu0 %v340
        %379 = vmatprep.subr.mxu0 0.0
        %380 = vmatpush1.msra.mxu0 %v339
        %381 = vmatprep.subr.mxu0 0.0
        %382 = vmatpush1.msra.mxu0 %v338
        %383 = vmatprep.subr.mxu0 0.0
        %384 = vmatpush1.msra.mxu0 %v337
        %385 = vmatprep.subr.mxu0 0.0
        %386 = vmatpush2.msra.mxu0 0.0
        %387 = vmatprep.subr.mxu0 0.0
        %388 = vmatpush2.msra.mxu0 0.0
        %389 = vmatprep.subr.mxu0 0.0
        %390 = vmatpush2.msra.mxu0 0.0
        %391 = vmatprep.subr.mxu0 0.0
        %392 = vmatpush2.msra.mxu0 0.0
        %393 = vmatprep.subr.mxu0 0.0
        %394 = vmatpush2.msra.mxu0 0.0
        %395 = vmatprep.subr.mxu0 0.0
        %396 = vmatpush2.msra.mxu0 0.0
        %397 = vmatprep.subr.mxu0 0.0
        %398 = vmatpush2.msra.mxu0 0.0
        %399 = vmatprep.subr.mxu0 0.0
        %400 = vmatpush2.msra.mxu0 0.0
        %401 = vmatprep.subr.mxu0 0.0
        %402 = vmatpush2.msra.mxu0 0.0
        %403 = vmatprep.subr.mxu0 0.0
        %404 = vmatpush2.msra.mxu0 0.0
        %405 = vmatprep.subr.mxu0 0.0
        %406 = vmatpush2.msra.mxu0 0.0
        %407 = vmatprep.subr.mxu0 0.0
        %408 = vmatpush2.msra.mxu0 0.0
        %409 = vmatprep.subr.mxu0 0.0
        %410 = vmatpush2.msra.mxu0 0.0
        %411 = vmatprep.subr.mxu0 0.0
        %412 = vmatpush2.msra.mxu0 0.0
        %413 = vmatprep.subr.mxu0 0.0
        %414 = vmatpush2.msra.mxu0 0.0
        %415 = vmatprep.subr.mxu0 0.0
        %416 = vmatpush2.msra.mxu0 0.0
        %417 = vmatprep.mubr.f32.mxu0 0.0
        %418 = vmatmul.mubr.f32.gmra.mxu0 %v336
        %v419 = vpop.f32.mrf.mxu0
        %v420 = vadd.f32 0.0, %v419
        %v421 = vpop.f32.mrf.mxu0
        %422 = vdwg.mxu0
        %vm423 = vcmask 31744
        %v424 = vsel %vm423, %v420, -inf
        %425 = vmax.xlane.f32.xlu0 %v424
        %v426 = vpop.xlane.xlu0 %425
        %v427 = vsub.f32 %v420, %v426
        %v428 = vmul.f32 %v427, 1.442695
        %v429 = vpow.pop %v428
        %v430 = vsel %vm423, %v429, 0.0
        %431 = vadd.xlane.f32.xlu0 %v430
        %v432 = vpop.xlane.xlu0 %431
        %v433 = vrcp.pop %v432
        %v434 = vmul.f32 %v429, %v433
        %v435 = vld [vmem:[%s4] sm:$0xff]
        %v436 = vld [vmem:[%s4 + $0x8] sm:$0xff]
        %v437 = vld [vmem:[%s4 + $0x10] sm:$0xff]
        %v438 = vld [vmem:[%s4 + $0x18] sm:$0xff]
        %v439 = vld [vmem:[%s4 + $0x20] sm:$0xff]
        %v440 = vld [vmem:[%s4 + $0x28] sm:$0xff]
        %v441 = vld [vmem:[%s4 + $0x30] sm:$0xff]
        %v442 = vld [vmem:[%s4 + $0x38] sm:$0xff]
        %v443 = vld [vmem:[%s4 + $0x40] sm:$0xff]
        %v444 = vld [vmem:[%s4 + $0x48] sm:$0xff]
        %v445 = vld [vmem:[%s4 + $0x50] sm:$0xff]
        %v446 = vld [vmem:[%s4 + $0x58] sm:$0xff]
        %v447 = vld [vmem:[%s4 + $0x60] sm:$0xff]
        %v448 = vld [vmem:[%s4 + $0x68] sm:$0xff]
        %v449 = vld [vmem:[%s4 + $0x70] sm:$0xff]
        %v450 = vld [vmem:[%s4 + $0x78] sm:$0xff]
        %451 = vmatprep.subr.mxu0 0.0
        %452 = vmatpush1.msra.mxu0 %v450
        %453 = vmatprep.subr.mxu0 0.0
        %454 = vmatpush1.msra.mxu0 %v449
        %455 = vmatprep.subr.mxu0 0.0
        %456 = vmatpush1.msra.mxu0 %v448
        %457 = vmatprep.subr.mxu0 0.0
        %458 = vmatpush1.msra.mxu0 %v447
        %459 = vmatprep.subr.mxu0 0.0
        %460 = vmatpush1.msra.mxu0 %v446
        %461 = vmatprep.subr.mxu0 0.0
        %462 = vmatpush1.msra.mxu0 %v445
        %463 = vmatprep.subr.mxu0 0.0
        %464 = vmatpush1.msra.mxu0 %v444
        %465 = vmatprep.subr.mxu0 0.0
        %466 = vmatpush1.msra.mxu0 %v443
        %467 = vmatprep.subr.mxu0 0.0
        %468 = vmatpush1.msra.mxu0 %v442
        %469 = vmatprep.subr.mxu0 0.0
        %470 = vmatpush1.msra.mxu0 %v441
        %471 = vmatprep.subr.mxu0 0.0
        %472 = vmatpush1.msra.mxu0 %v440
        %473 = vmatprep.subr.mxu0 0.0
        %474 = vmatpush1.msra.mxu0 %v439
        %475 = vmatprep.subr.mxu0 0.0
        %476 = vmatpush1.msra.mxu0 %v438
        %477 = vmatprep.subr.mxu0 0.0
        %478 = vmatpush1.msra.mxu0 %v437
        %479 = vmatprep.subr.mxu0 0.0
        %480 = vmatpush1.msra.mxu0 %v436
        %481 = vmatprep.subr.mxu0 0.0
        %482 = vmatpush1.msra.mxu0 %v435
        %483 = vmatprep.subr.mxu0 0.0
        %484 = vmatpush2.msra.mxu0 0.0
        %485 = vmatprep.subr.mxu0 0.0
        %486 = vmatpush2.msra.mxu0 0.0
        %487 = vmatprep.subr.mxu0 0.0
        %488 = vmatpush2.msra.mxu0 0.0
        %489 = vmatprep.subr.mxu0 0.0
        %490 = vmatpush2.msra.mxu0 0.0
        %491 = vmatprep.subr.mxu0 0.0
        %492 = vmatpush2.msra.mxu0 0.0
        %493 = vmatprep.subr.mxu0 0.0
        %494 = vmatpush2.msra.mxu0 0.0
        %495 = vmatprep.subr.mxu0 0.0
        %496 = vmatpush2.msra.mxu0 0.0
        %497 = vmatprep.subr.mxu0 0.0
        %498 = vmatpush2.msra.mxu0 0.0
        %499 = vmatprep.subr.mxu0 0.0
        %500 = vmatpush2.msra.mxu0 0.0
        %501 = vmatprep.subr.mxu0 0.0
        %502 = vmatpush2.msra.mxu0 0.0
        %503 = vmatprep.subr.mxu0 0.0
        %504 = vmatpush2.msra.mxu0 0.0
        %505 = vmatprep.subr.mxu0 0.0
        %506 = vmatpush2.msra.mxu0 0.0
        %507 = vmatprep.subr.mxu0 0.0
        %508 = vmatpush2.msra.mxu0 0.0
        %509 = vmatprep.subr.mxu0 0.0
        %510 = vmatpush2.msra.mxu0 0.0
        %511 = vmatprep.subr.mxu0 0.0
        %512 = vmatpush2.msra.mxu0 0.0
        %513 = vmatprep.subr.mxu0 0.0
        %514 = vmatpush2.msra.mxu0 0.0
        %515 = vmatprep.mubr.f32.mxu0 0.0
        %516 = vmatmul.mubr.f32.gmra.mxu0 %v336
        %v517 = vpop.f32.mrf.mxu0
        %v518 = vadd.f32 0.0, %v517
        %v519 = vpop.f32.mrf.mxu0
        %520 = vdwg.mxu0
        %v521 = vld [vmem:[%s5] sm:$0xf]
        %v523 = vsel %vm423, %v434, 0
        %vm525 = vcmask 1043456
        %v527 = vsel %vm525, %v521, 0
        %529 = vmatprep.subr.mxu0 0.0
        %530 = vmatpush1.msra.mxu0 0.0
        %531 = vmatprep.subr.mxu0 0.0
        %532 = vmatpush1.msra.mxu0 0.0
        %533 = vmatprep.subr.mxu0 0.0
        %534 = vmatpush1.msra.mxu0 0.0
        %535 = vmatprep.subr.mxu0 0.0
        %536 = vmatpush1.msra.mxu0 0.0
        %537 = vmatprep.subr.mxu0 0.0
        %538 = vmatpush1.msra.mxu0 0.0
        %539 = vmatprep.subr.mxu0 0.0
        %540 = vmatpush1.msra.mxu0 0.0
        %541 = vmatprep.subr.mxu0 0.0
        %542 = vmatpush1.msra.mxu0 0.0
        %543 = vmatprep.subr.mxu0 0.0
        %544 = vmatpush1.msra.mxu0 0.0
        %545 = vmatprep.subr.mxu0 0.0
        %546 = vmatpush1.msra.mxu0 0.0
        %547 = vmatprep.subr.mxu0 0.0
        %548 = vmatpush1.msra.mxu0 0.0
        %549 = vmatprep.subr.mxu0 0.0
        %550 = vmatpush1.msra.mxu0 0.0
        %551 = vmatprep.subr.mxu0 0.0
        %552 = vmatpush1.msra.mxu0 0.0
        %553 = vmatprep.subr.mxu0 0.0
        %554 = vmatpush1.msra.mxu0 0.0
        %555 = vmatprep.subr.mxu0 0.0
        %556 = vmatpush1.msra.mxu0 0.0
        %557 = vmatprep.subr.mxu0 0.0
        %558 = vmatpush1.msra.mxu0 0.0
        %559 = vmatprep.subr.mxu0 0.0
        %560 = vmatpush1.msra.mxu0 %v527
        %561 = vmatprep.subr.mxu0 0.0
        %562 = vmatpush2.msra.mxu0 0.0
        %563 = vmatprep.subr.mxu0 0.0
        %564 = vmatpush2.msra.mxu0 0.0
        %565 = vmatprep.subr.mxu0 0.0
        %566 = vmatpush2.msra.mxu0 0.0
        %567 = vmatprep.subr.mxu0 0.0
        %568 = vmatpush2.msra.mxu0 0.0
        %569 = vmatprep.subr.mxu0 0.0
        %570 = vmatpush2.msra.mxu0 0.0
        %571 = vmatprep.subr.mxu0 0.0
        %572 = vmatpush2.msra.mxu0 0.0
        %573 = vmatprep.subr.mxu0 0.0
        %574 = vmatpush2.msra.mxu0 0.0
        %575 = vmatprep.subr.mxu0 0.0
        %576 = vmatpush2.msra.mxu0 0.0
        %577 = vmatprep.subr.mxu0 0.0
        %578 = vmatpush2.msra.mxu0 0.0
        %579 = vmatprep.subr.mxu0 0.0
        %580 = vmatpush2.msra.mxu0 0.0
        %581 = vmatprep.subr.mxu0 0.0
        %582 = vmatpush2.msra.mxu0 0.0
        %583 = vmatprep.subr.mxu0 0.0
        %584 = vmatpush2.msra.mxu0 0.0
        %585 = vmatprep.subr.mxu0 0.0
        %586 = vmatpush2.msra.mxu0 0.0
        %587 = vmatprep.subr.mxu0 0.0
        %588 = vmatpush2.msra.mxu0 0.0
        %589 = vmatprep.subr.mxu0 0.0
        %590 = vmatpush2.msra.mxu0 0.0
        %591 = vmatprep.subr.mxu0 0.0
        %592 = vmatpush2.msra.mxu0 0.0
        %593 = vmatprep.mubr.f32.mxu0 0.0
        %594 = vmatmul.mubr.f32.gmra.mxu0 %v523
        %v595 = vpop.f32.mrf.mxu0
        %v596 = vadd.f32 0.0, %v595
        %v597 = vpop.f32.mrf.mxu0
        %598 = vdwg.mxu0
        %v599 = vmul.f32 %v518, %v596
        %v600 = vld [vmem:[%s335] sm:$0xff]
        %v601 = vld [vmem:[%s335 + $0x8] sm:$0xff]
        %vm602 = vcmask 130048
        %v604 = vsel %vm602, %v599, 0
        %606 = vmatprep.subr.mxu0 0.0
        %607 = vmatpush1.msra.mxu0 0.0
        %608 = vmatprep.subr.mxu0 0.0
        %609 = vmatpush1.msra.mxu0 0.0
        %610 = vmatprep.subr.mxu0 0.0
        %611 = vmatpush1.msra.mxu0 0.0
        %612 = vmatprep.subr.mxu0 0.0
        %613 = vmatpush1.msra.mxu0 0.0
        %614 = vmatprep.subr.mxu0 0.0
        %615 = vmatpush1.msra.mxu0 0.0
        %616 = vmatprep.subr.mxu0 0.0
        %617 = vmatpush1.msra.mxu0 0.0
        %618 = vmatprep.subr.mxu0 0.0
        %619 = vmatpush1.msra.mxu0 0.0
        %620 = vmatprep.subr.mxu0 0.0
        %621 = vmatpush1.msra.mxu0 0.0
        %622 = vmatprep.subr.mxu0 0.0
        %623 = vmatpush1.msra.mxu0 0.0
        %624 = vmatprep.subr.mxu0 0.0
        %625 = vmatpush1.msra.mxu0 0.0
        %626 = vmatprep.subr.mxu0 0.0
        %627 = vmatpush1.msra.mxu0 0.0
        %628 = vmatprep.subr.mxu0 0.0
        %629 = vmatpush1.msra.mxu0 0.0
        %630 = vmatprep.subr.mxu0 0.0
        %631 = vmatpush1.msra.mxu0 0.0
        %632 = vmatprep.subr.mxu0 0.0
        %633 = vmatpush1.msra.mxu0 0.0
        %634 = vmatprep.subr.mxu0 0.0
        %635 = vmatpush1.msra.mxu0 %v601
        %636 = vmatprep.subr.mxu0 0.0
        %637 = vmatpush1.msra.mxu0 %v600
        %638 = vmatprep.subr.mxu0 0.0
        %639 = vmatpush2.msra.mxu0 0.0
        %640 = vmatprep.subr.mxu0 0.0
        %641 = vmatpush2.msra.mxu0 0.0
        %642 = vmatprep.subr.mxu0 0.0
        %643 = vmatpush2.msra.mxu0 0.0
        %644 = vmatprep.subr.mxu0 0.0
        %645 = vmatpush2.msra.mxu0 0.0
        %646 = vmatprep.subr.mxu0 0.0
        %647 = vmatpush2.msra.mxu0 0.0
        %648 = vmatprep.subr.mxu0 0.0
        %649 = vmatpush2.msra.mxu0 0.0
        %650 = vmatprep.subr.mxu0 0.0
        %651 = vmatpush2.msra.mxu0 0.0
        %652 = vmatprep.subr.mxu0 0.0
        %653 = vmatpush2.msra.mxu0 0.0
        %654 = vmatprep.subr.mxu0 0.0
        %655 = vmatpush2.msra.mxu0 0.0
        %656 = vmatprep.subr.mxu0 0.0
        %657 = vmatpush2.msra.mxu0 0.0
        %658 = vmatprep.subr.mxu0 0.0
        %659 = vmatpush2.msra.mxu0 0.0
        %660 = vmatprep.subr.mxu0 0.0
        %661 = vmatpush2.msra.mxu0 0.0
        %662 = vmatprep.subr.mxu0 0.0
        %663 = vmatpush2.msra.mxu0 0.0
        %664 = vmatprep.subr.mxu0 0.0
        %665 = vmatpush2.msra.mxu0 0.0
        %666 = vmatprep.subr.mxu0 0.0
        %667 = vmatpush2.msra.mxu0 0.0
        %668 = vmatprep.subr.mxu0 0.0
        %669 = vmatpush2.msra.mxu0 0.0
        %670 = vmatprep.mubr.f32.mxu0 0.0
        %671 = vmatmul.mubr.f32.gmra.mxu0 %v604
        %v672 = vpop.f32.mrf.mxu0
        %v673 = vadd.f32 0.0, %v672
        %v674 = vpop.f32.mrf.mxu0
        %675 = vdwg.mxu0
        %v676 = vld [vmem:[%s328] sm:$0xff]
        %v677 = vld [vmem:[%s328 + $0x8] sm:$0xff]
        %v678 = vld [vmem:[%s328 + $0x10] sm:$0xff]
        %v679 = vld [vmem:[%s328 + $0x18] sm:$0xff]
        %v680 = vld [vmem:[%s328 + $0x20] sm:$0xff]
        %v681 = vld [vmem:[%s328 + $0x28] sm:$0xff]
        %v682 = vld [vmem:[%s328 + $0x30] sm:$0xff]
        %v683 = vld [vmem:[%s328 + $0x38] sm:$0xff]
        %v684 = vld [vmem:[%s328 + $0x40] sm:$0xff]
        %v685 = vld [vmem:[%s328 + $0x48] sm:$0xff]
        %v686 = vld [vmem:[%s328 + $0x50] sm:$0xff]
        %v687 = vld [vmem:[%s328 + $0x58] sm:$0xff]
        %v688 = vld [vmem:[%s328 + $0x60] sm:$0xff]
        %v689 = vld [vmem:[%s328 + $0x68] sm:$0xff]
        %v690 = vld [vmem:[%s328 + $0x70] sm:$0xff]
        %v691 = vld [vmem:[%s328 + $0x78] sm:$0xff]
        %v692 = vld [vmem:[%s331] sm:$0x1]
        %v694 = vlaneseq
        %v695 = vshrl.u32 %v694, 7
        %v696 = vsub.s32 0, %v695
        %v697 = vrot.slane %v692, %v696
        %699 = vmatprep.subr.mxu0 0.0
        %700 = vmatpush1.msra.mxu0 %v691
        %701 = vmatprep.subr.mxu0 0.0
        %702 = vmatpush1.msra.mxu0 %v690
        %703 = vmatprep.subr.mxu0 0.0
        %704 = vmatpush1.msra.mxu0 %v689
        %705 = vmatprep.subr.mxu0 0.0
        %706 = vmatpush1.msra.mxu0 %v688
        %707 = vmatprep.subr.mxu0 0.0
        %708 = vmatpush1.msra.mxu0 %v687
        %709 = vmatprep.subr.mxu0 0.0
        %710 = vmatpush1.msra.mxu0 %v686
        %711 = vmatprep.subr.mxu0 0.0
        %712 = vmatpush1.msra.mxu0 %v685
        %713 = vmatprep.subr.mxu0 0.0
        %714 = vmatpush1.msra.mxu0 %v684
        %715 = vmatprep.subr.mxu0 0.0
        %716 = vmatpush1.msra.mxu0 %v683
        %717 = vmatprep.subr.mxu0 0.0
        %718 = vmatpush1.msra.mxu0 %v682
        %719 = vmatprep.subr.mxu0 0.0
        %720 = vmatpush1.msra.mxu0 %v681
        %721 = vmatprep.subr.mxu0 0.0
        %722 = vmatpush1.msra.mxu0 %v680
        %723 = vmatprep.subr.mxu0 0.0
        %724 = vmatpush1.msra.mxu0 %v679
        %725 = vmatprep.subr.mxu0 0.0
        %726 = vmatpush1.msra.mxu0 %v678
        %727 = vmatprep.subr.mxu0 0.0
        %728 = vmatpush1.msra.mxu0 %v677
        %729 = vmatprep.subr.mxu0 0.0
        %730 = vmatpush1.msra.mxu0 %v676
        %731 = vmatprep.subr.mxu0 0.0
        %732 = vmatpush2.msra.mxu0 0.0
        %733 = vmatprep.subr.mxu0 0.0
        %734 = vmatpush2.msra.mxu0 0.0
        %735 = vmatprep.subr.mxu0 0.0
        %736 = vmatpush2.msra.mxu0 0.0
        %737 = vmatprep.subr.mxu0 0.0
        %738 = vmatpush2.msra.mxu0 0.0
        %739 = vmatprep.subr.mxu0 0.0
        %740 = vmatpush2.msra.mxu0 0.0
        %741 = vmatprep.subr.mxu0 0.0
        %742 = vmatpush2.msra.mxu0 0.0
        %743 = vmatprep.subr.mxu0 0.0
        %744 = vmatpush2.msra.mxu0 0.0
        %745 = vmatprep.subr.mxu0 0.0
        %746 = vmatpush2.msra.mxu0 0.0
        %747 = vmatprep.subr.mxu0 0.0
        %748 = vmatpush2.msra.mxu0 0.0
        %749 = vmatprep.subr.mxu0 0.0
        %750 = vmatpush2.msra.mxu0 0.0
        %751 = vmatprep.subr.mxu0 0.0
        %752 = vmatpush2.msra.mxu0 0.0
        %753 = vmatprep.subr.mxu0 0.0
        %754 = vmatpush2.msra.mxu0 0.0
        %755 = vmatprep.subr.mxu0 0.0
        %756 = vmatpush2.msra.mxu0 0.0
        %757 = vmatprep.subr.mxu0 0.0
        %758 = vmatpush2.msra.mxu0 0.0
        %759 = vmatprep.subr.mxu0 0.0
        %760 = vmatpush2.msra.mxu0 0.0
        %761 = vmatprep.subr.mxu0 0.0
        %762 = vmatpush2.msra.mxu0 0.0
        %763 = vmatprep.mubr.f32.mxu0 0.0
        %764 = vmatmul.mubr.f32.gmra.mxu0 %v336
        %v765 = vpop.f32.mrf.mxu0
        %v766 = vadd.f32 %v697, %v765
        %v767 = vpop.f32.mrf.mxu0
        %768 = vdwg.mxu0
        %v769 = vadd.f32 %v766, %v673
        %770 = vst [vmem:[%s320] sm:$0xff] %v769
        %s771 = sand.u32 %s210, 1
        %s772 = scalar_lea.sflag [#allocation3], %s771
        %s773 = sand.u32 %s210, 1
        %s774 = smul.addr %s773, 8
        %s775 = scalar_lea.vmem [#allocation2], %s774
        // Predicated region
        $region49: #{tpu_custom_call.1} parent=47 // pred_check
          %p776 = pneg %p220
        $region50: #{tpu_custom_call.1} parent=47 // pred_check_branch
          %778 = sbr.rel (%p776) target = $region52
        $region51: #{tpu_custom_call.1} parent=47 // pred_region
          %s780 = ssub.s32 128, 128
          %781 = vsyncadd %s772, %s780
          %s782 = sadd.s32 %s25, %s26
          %s783 = smul.addr %s782, 128
          %s784 = scalar_lea.hbm %s7, %s783
          %s786 = sshll.u32 %s775, 4
          %s787 = int_to_ptr.vmem [resolvable:$true] %s786
          %789 = dma.vmem_to_hbm [thread:$0]  %s787, 128, %s784, %s772
        $region52: #{tpu_custom_call.1} parent=47 // pred_fallthru
          _
      $region48: #{tpu_custom_call.1} parent=5 // pred_fallthru
        _
      %p790 = scmp.le.s32.totalorder 2, %s16
      // Predicated region
      $region53: #{tpu_custom_call.1} parent=5 // pred_check
        %p791 = pneg %p790
      $region54: #{tpu_custom_call.1} parent=5 // pred_check_branch
        %793 = sbr.rel (%p791) target = $region56
      $region55: #{tpu_custom_call.1} parent=5 // pred_region
        %s794 = ssub.s32 %s16, 2
        // Predicated region
        $region57: #{tpu_custom_call.1} parent=55 // pred_check
          %p795 = pneg %p226
        $region58: #{tpu_custom_call.1} parent=55 // pred_check_branch
          %797 = sbr.rel (%p795) target = $region60
        $region59: #{tpu_custom_call.1} parent=55 // pred_region
          %s798 = sand.u32 %s211, 1
          %s799 = scalar_lea.sflag [#allocation3], %s798
          %s800 = sand.u32 %s211, 1
          %s801 = smul.addr %s800, 8
          %s802 = scalar_lea.vmem [#allocation2], %s801
          %803 = dma.done %s799, 128
        $region60: #{tpu_custom_call.1} parent=55 // pred_fallthru
          _
      $region56: #{tpu_custom_call.1} parent=5 // pred_fallthru
        _
    $region6: #{tpu_custom_call.1} parent=1 // loop_footer
      %s20 = sadd.s32 1, %s16
    $region7: #{tpu_custom_call.1} parent=1 // loop_footer_branch
      %15 = sbr.rel target = $region3
    $region8: #{tpu_custom_call.1} parent=1 // loop_exit
      _
    %804 = vsyncpa [#allocation3], 1
    %s805 = scalar_lea.sflag [#allocation3], 1
    %806 = vsyncpa %s805, 1

</llo_original>
